<compile_context>
chip_gen: v7x
topology: tpu7x:2x2x1
jax: 0.10.0
libtpu: 0.0.40
codegen_flags: <defaults>
</compile_context>

<pallas_src>
import jax
import jax.numpy as jnp
from jax import lax
from jax.experimental import pallas as pl
from jax.experimental.pallas import tpu as pltpu


# ----------------------------------------------------------------------------
# Pallas kernels
# ----------------------------------------------------------------------------
def _pfn_kernel(x_ref, w_ref, b_ref, o_ref):
    """Fused DynamicEmbedder PFN, lane-dense packed form.

    Each input row packs 8 points: x[g, j*6:(j+1)*6] = [xyz, voxel_center] of
    point 8g+j.  w is the (48,128) block-diagonal replication of the folded
    (6,16) PFN weight, so each output row packs the 8 points' 16-ch features
    into 128 lanes.  One MXU push per tile, fully lane-dense 128-wide store.
    """
    y = jnp.dot(x_ref[...], w_ref[...], preferred_element_type=jnp.float32)
    y = jnp.maximum(y + b_ref[...], 0.0)
    o_ref[...] = y.astype(o_ref.dtype)


def _backbone_kernel(x_ref, w1_ref, b1_ref, w2_ref, b2_ref, o_ref):
    """Network_4D pointwise approx: 2-layer ReLU MLP, lane-dense packed.

    x packs 8 voxels * 16 ch per 128-lane row (bf16, fed straight to the MXU
    with f32 accumulation).  max(x, 0) kills the -inf segment_max identity of
    empty voxels (PFN output is post-ReLU so occupied voxels are unchanged);
    no occ input / trailing mask: empty voxels are never gathered downstream.
    """
    x = jnp.maximum(x_ref[...], 0.0)                       # bf16 -> MXU directly
    h = jnp.dot(x, w1_ref[...], preferred_element_type=jnp.float32)
    h = jnp.maximum(h + b1_ref[...], 0.0)                  # f32 epilogue
    y = jnp.dot(h.astype(w2_ref.dtype), w2_ref[...],
                preferred_element_type=jnp.float32)
    y = jnp.maximum(y + b2_ref[...], 0.0)
    o_ref[...] = y.astype(o_ref.dtype)


def _head_kernel(vf_ref, pf_ref, w1v_ref, w1p_ref, b1_ref, w2t_ref, b2_ref,
                 o_ref):
    """Point_head: concat([voxel_feat, point_feat]) @ W1 (split) -> ReLU -> W2.

    The final layer is computed as W2^T (8,32) contracted with h (tile,32) on
    their last dims (transposed-rhs dot_general), so the (8, tile) result has
    points on the lane axis: the store is fully lane-dense and the HBM slab
    is 8 f32 rows (rows 0..2 hold flow xyz, rows 3..7 are zero) instead of a
    128-wide padded per-point output.
    """
    h = jnp.dot(vf_ref[...], w1v_ref[...], preferred_element_type=jnp.float32)
    h = h + jnp.dot(pf_ref[...], w1p_ref[...], preferred_element_type=jnp.float32)
    h = jnp.maximum(h + b1_ref[...], 0.0)                  # (tile, 32) f32
    y_t = lax.dot_general(w2t_ref[...], h,
                          dimension_numbers=(((1,), (1,)), ((), ())),
                          preferred_element_type=jnp.float32)   # (8, tile)
    o_ref[...] = (y_t + b2_ref[...]).astype(o_ref.dtype)


# ----------------------------------------------------------------------------
# Generic row-tiled pallas_call helper (no host-side padding copies)
# ----------------------------------------------------------------------------
def _row_call(kernel, row_arrays, const_arrays, *, out_cols, out_dtype,
              out_transposed=False, max_tile_rows=8192,
              vmem_limit_bytes=32 * 1024 * 1024):
    """Run kernel(row_refs..., const_refs..., o_ref) tiled over rows.

    Row arrays are tiled along dim 0; const arrays (weights / biases) are
    broadcast to every grid step.  grid = pl.cdiv(rows, tile); Pallas masks
    the partial tail block so no zero-pad copy is needed.

    out_transposed=False -> output (M, out_cols), row-tiled.
    out_transposed=True  -> output (out_cols, M), lane axis = rows (for the
                            point-head flow slab).
    """
    M = row_arrays[0].shape[0]
    tile = M if M <= max_tile_rows else max_tile_rows    # max_tile_rows % 128 == 0
    grid_m = pl.cdiv(M, tile)

    in_specs = [pl.BlockSpec((tile, a.shape[1]), lambda i: (i, 0))
                for a in row_arrays]
    in_specs += [pl.BlockSpec(a.shape, lambda i: (0, 0)) for a in const_arrays]

    if out_transposed:
        out_shape = jax.ShapeDtypeStruct((out_cols, M), out_dtype)
        out_spec = pl.BlockSpec((out_cols, tile), lambda i: (0, i))
    else:
        out_shape = jax.ShapeDtypeStruct((M, out_cols), out_dtype)
        out_spec = pl.BlockSpec((tile, out_cols), lambda i: (i, 0))

    return pl.pallas_call(
        kernel,
        out_shape=out_shape,
        grid_spec=pltpu.PrefetchScalarGridSpec(
            num_scalar_prefetch=0,
            grid=(grid_m,),
            in_specs=in_specs,
            out_specs=out_spec,
        ),
        compiler_params=pltpu.CompilerParams(
            dimension_semantics=("parallel",),
            vmem_limit_bytes=vmem_limit_bytes),
    )(*row_arrays, *const_arrays)


def _block_diag(w, reps):
    """Block-diagonal replication: (k, n) -> (reps*k, reps*n)."""
    k, n = w.shape
    out = jnp.zeros((reps * k, reps * n), w.dtype)
    for j in range(reps):
        out = out.at[j * k:(j + 1) * k, j * n:(j + 1) * n].set(w)
    return out


# ----------------------------------------------------------------------------
# Flow4D (Pallas / JAX re-implementation)
# ----------------------------------------------------------------------------
class Flow4DPallas:
    def __init__(self,
                 voxel_size=(0.4, 0.4, 0.4),
                 point_cloud_range=(-3.2, -3.2, -1.6, 3.2, 3.2, 1.6),
                 grid_feature_size=(16, 16, 8),
                 num_frames=2,
                 seed=0,
                 max_tile_rows=8192,
                 feat_dtype=jnp.bfloat16):
        self.point_output_ch = 16   # per-point feat channels (PFN output)
        self.voxel_output_ch = 16   # backbone voxel feat channels
        self.num_frames = num_frames
        self.voxel_size = jnp.asarray(voxel_size, jnp.float32)
        self.pc_range_min = jnp.asarray(point_cloud_range[:3], jnp.float32)
        self.grid_size = tuple(int(g) for g in grid_feature_size)
        # multiple of 128 so partial-grid blocks keep lane-dense output tiles
        self.max_tile_rows = max(128, (int(max_tile_rows) // 128) * 128)
        self.feat_dtype = feat_dtype

        k = jax.random.PRNGKey(seed)
        ks = jax.random.split(k, 8)
        pch, vch = self.point_output_ch, self.voxel_output_ch
        scale = 0.1
        # reference (f32) parameters, analogous to the torch state_dict
        self.params = {
            # DynamicEmbedder_4D PFN: [xyz, xyz - voxel_center] -> 16
            "pfn_w": jax.random.normal(ks[0], (6, pch), jnp.float32) * scale,
            "pfn_b": jnp.zeros((pch,), jnp.float32),
            # Network_4D approximation (pointwise voxel MLP, 16 -> 16 -> 16)
            "bk_w1": jax.random.normal(ks[1], (pch, vch), jnp.float32) * scale,
            "bk_b1": jnp.zeros((vch,), jnp.float32),
            "bk_w2": jax.random.normal(ks[2], (vch, vch), jnp.float32) * scale,
            "bk_b2": jnp.zeros((vch,), jnp.float32),
            # Point_head: concat(voxel 16, point 16) -> 32 -> 3
            "hd_w1": jax.random.normal(ks[3], (vch + pch, 32), jnp.float32) * scale,
            "hd_b1": jnp.zeros((32,), jnp.float32),
            "hd_w2": jax.random.normal(ks[4], (32, 3), jnp.float32) * scale,
            "hd_b2": jnp.zeros((3,), jnp.float32),
        }

        # ---- kernel-ready (folded / block-diag / bf16) parameters -----------
        # PFN: relu([p, p-c] @ W + b) = relu([p, c] @ [[Wt+Wb],[-Wb]] + b);
        # block-diag-replicate 8x so 8 packed points map to 128 output lanes.
        pfn_w = self.params["pfn_w"]
        w6 = jnp.concatenate([pfn_w[:3] + pfn_w[3:], -pfn_w[3:]], axis=0)   # (6,16)
        self._pfn_w_bd = _block_diag(w6, 8)                                 # (48,128) f32
        self._pfn_b = jnp.tile(self.params["pfn_b"].reshape(1, -1), (1, 8)) # (1,128) f32

        # Backbone: block-diag replicated, bf16 weights (bf16 x bf16 -> f32 MXU)
        self._bk_w1_bd = _block_diag(self.params["bk_w1"], 8).astype(jnp.bfloat16)
        self._bk_b1 = jnp.tile(self.params["bk_b1"].reshape(1, -1), (1, 8))  # f32
        self._bk_w2_bd = _block_diag(self.params["bk_w2"], 8).astype(jnp.bfloat16)
        self._bk_b2 = jnp.tile(self.params["bk_b2"].reshape(1, -1), (1, 8))  # f32

        # Head: split W1 (concat folded), bf16 weights; final layer kept f32 and
        # transposed / sublane-padded to 8 so the kernel emits an (8, M) slab.
        hd_w1 = self.params["hd_w1"]
        self._hd_w1v = hd_w1[:vch].astype(jnp.bfloat16)        # (16, 32)
        self._hd_w1p = hd_w1[vch:].astype(jnp.bfloat16)        # (16, 32)
        self._hd_b1 = self.params["hd_b1"].reshape(1, -1)      # (1, 32) f32
        self._hd_w2t = jnp.zeros((8, 32), jnp.float32).at[:3, :].set(
            self.params["hd_w2"].T)                            # (8, 32) f32
        self._hd_b2c = jnp.zeros((8, 1), jnp.float32).at[:3, 0].set(
            self.params["hd_b2"])                              # (8, 1) f32

    # ---- Pallas stage wrappers ----------------------------------------------
    def _pfn(self, x_packed):
        # x_packed: (M//8, 48) f32  ->  (M//8, 128) bf16 lane-dense
        return _row_call(_pfn_kernel, [x_packed],
                         [self._pfn_w_bd, self._pfn_b],
                         out_cols=128, out_dtype=self.feat_dtype,
                         max_tile_rows=self.max_tile_rows)

    def _backbone(self, x_packed):
        # x_packed: (2BG//8, 128) bf16  ->  (2BG//8, 128) bf16 lane-dense
        return _row_call(_backbone_kernel, [x_packed],
                         [self._bk_w1_bd, self._bk_b1,
                          self._bk_w2_bd, self._bk_b2],
                         out_cols=128, out_dtype=self.feat_dtype,
                         max_tile_rows=self.max_tile_rows)

    def _head(self, vox_feats, pt_feats):
        # (BN,16) bf16 x2  ->  (8, BN) f32 slab, rows 0..2 = flow xyz
        return _row_call(_head_kernel, [vox_feats, pt_feats],
                         [self._hd_w1v, self._hd_w1p, self._hd_b1,
                          self._hd_w2t, self._hd_b2c],
                         out_cols=8, out_dtype=jnp.float32,
                         out_transposed=True,
                         max_tile_rows=self.max_tile_rows)

    # ---- forward -------------------------------------------------------------
    def forward(self, batch):
        pc0s, pc1s = batch["pc0"], batch["pc1"]            # (B, N, 3)
        pose0s, pose1s = batch["pose0"], batch["pose1"]    # (B, 4, 4)
        B, N, _ = pc0s.shape
        gx, gy, gz = self.grid_size
        G = gx * gy * gz
        pch = self.point_output_ch

        # --- Data Preprocess (wrap_batch_pcs): ego-motion compensation -------
        # closed-form rigid inverse: pose1^-1 @ pose0 = [R1^T R0 | R1^T (t0-t1)]
        R0, t0 = pose0s[:, :3, :3], pose0s[:, :3, 3]
        R1, t1 = pose1s[:, :3, :3], pose1s[:, :3, 3]
        R1t = jnp.swapaxes(R1, 1, 2)
        Rrel = jnp.einsum("bij,bjk->bik", R1t, R0)
        trel = jnp.einsum("bij,bj->bi", R1t, t0 - t1)
        pc0_t = jnp.einsum("bij,bnj->bni", Rrel, pc0s) + trel[:, None, :]
        pose_flow = pc0_t - pc0s

        # --- 4D voxelization (DynamicEmbedder_4D) ----------------------------
        # row layout: [frame0 (pc0_t) b=0..B-1] then [frame1 (pc1) b=0..B-1]
        pts_all = jnp.concatenate(
            [pc0_t.reshape(B * N, 3), pc1s.reshape(B * N, 3)], axis=0)
        coords = jnp.floor((pts_all - self.pc_range_min) /
                           self.voxel_size).astype(jnp.int32)
        # TODO(synk): real Flow4D drops out-of-range points; we clip instead.
        coords = jnp.clip(coords, 0,
                          jnp.asarray([gx - 1, gy - 1, gz - 1], jnp.int32))
        vox_id = (coords[:, 0] * gy + coords[:, 1]) * gz + coords[:, 2]
        centers = (coords.astype(jnp.float32) + 0.5) * self.voxel_size \
            + self.pc_range_min

        M = 2 * B * N
        assert M % 8 == 0, "2*B*N must be a multiple of 8 for packed tiles"
        # (M, 6) -> (M//8, 48): free row-major reshape, 8 points per packed row
        x6 = jnp.concatenate([pts_all, centers], axis=1).reshape(M // 8, 48)
        pfn_out = self._pfn(x6)                              # (M//8, 128) bf16
        point_feats = pfn_out.reshape(M, pch)                # zero-copy view

        # scatter-max pooling per (frame, batch, voxel)
        # TODO(synk): data-dependent scatter stays in XLA (segment_max).
        b_of_pt = jnp.repeat(jnp.arange(B, dtype=jnp.int32), N)     # (BN,)
        fb = jnp.concatenate([b_of_pt, B + b_of_pt])                # (2BN,)
        seg = fb * G + vox_id                                        # (2BN,)
        n_seg = 2 * B * G
        assert n_seg % 8 == 0, "2*B*G must be a multiple of 8 for packed tiles"
        pooled = jax.ops.segment_max(point_feats, seg,
                                     num_segments=n_seg)             # (2BG,16)

        # --- 4D backbone (Network_4D, pointwise approximation) ---------------
        bk_out = self._backbone(pooled.reshape(n_seg // 8, 128))     # packed
        voxel_feats = bk_out.reshape(n_seg, self.voxel_output_ch)    # (2BG,16)

        # --- Seperate_to_3D: keep the pc0 (frame 0) slab ----------------------
        pc0_last = voxel_feats[: B * G]                              # (BG, 16)
        # (torch reference voxel-count assert removed: it compared an
        #  expression with itself and forced two host syncs mid-pipeline)

        # --- Point_head: voxel-to-point gather + fused 2-layer MLP ------------
        vox_id0 = vox_id[: B * N]
        gather_idx = b_of_pt * G + vox_id0
        # TODO(synk): fusing this gather into the head kernel needs a
        # sort-by-voxel or manual in-kernel DMA row gather; kept in XLA.
        per_pt_voxel_feat = jnp.take(pc0_last, gather_idx, axis=0)   # (BN, 16)
        pt_feats0 = point_feats[: B * N]                             # (BN, 16)
        head_out = self._head(per_pt_voxel_feat, pt_feats0)          # (8, BN)
        flow = head_out[:3, :].T.reshape(B, N, 3)                    # (B, N, 3)

        idxes = [jnp.arange(N, dtype=jnp.int32) for _ in range(B)]
        return {
            "flow": [flow[b] for b in range(B)],
            "pose_flow": [pose_flow[b] for b in range(B)],
            "pc0_valid_point_idxes": idxes,
            "pc0_points_lst": [pc0_t[b] for b in range(B)],
            "pc1_valid_point_idxes": idxes,
            "pc1_points_lst": [pc1s[b] for b in range(B)],
            "pch1_valid_point_idxes": None,   # num_frames == 2 -> no history
        }


# ----------------------------------------------------------------------------
# main
# ----------------------------------------------------------------------------
if __name__ == "__main__":
    key = jax.random.PRNGKey(0)
    B, N = 2, 256
    k0, k1 = jax.random.split(key, 2)

    lo = jnp.asarray([-3.0, -3.0, -1.5], jnp.float32)
    hi = jnp.asarray([3.0, 3.0, 1.5], jnp.float32)
    pc0 = jax.random.uniform(k0, (B, N, 3), jnp.float32) * (hi - lo) + lo
    pc1 = jax.random.uniform(k1, (B, N, 3), jnp.float32) * (hi - lo) + lo

    # poses: identity for pose0, small translation for pose1
    eye = jnp.eye(4, dtype=jnp.float32)
    pose0 = jnp.broadcast_to(eye, (B, 4, 4))
    shift = jnp.asarray([0.05, -0.02, 0.01], jnp.float32)
    pose1 = jnp.broadcast_to(eye, (B, 4, 4)).at[:, :3, 3].add(shift)

    batch = {"pc0": pc0, "pc1": pc1, "pose0": pose0, "pose1": pose1}

    model = Flow4DPallas(voxel_size=(0.4, 0.4, 0.4),
                         point_cloud_range=(-3.2, -3.2, -1.6, 3.2, 3.2, 1.6),
                         grid_feature_size=(16, 16, 8),
                         num_frames=2,
                         seed=0)

    res = model.forward(batch)
    jax.block_until_ready(res["flow"])
    assert res["flow"][0].shape == (N, 3)
    assert res["pose_flow"][0].shape == (N, 3)
    assert bool(jnp.all(jnp.isfinite(res["flow"][0])))
    print("KERNEL_OK")
</pallas_src>

<mosaic_0001>
module attributes {stable_mosaic.version = 11 : i64} {
  func.func @_pfn_kernel(%arg0: i32, %arg1: memref<128x48xf32, #tpu.memory_space<vmem>>, %arg2: memref<48x128xf32, #tpu.memory_space<vmem>>, %arg3: memref<1x128xf32, #tpu.memory_space<vmem>>, %arg4: memref<128x128xbf16, #tpu.memory_space<vmem>>) attributes {dimension_semantics = [#tpu.dimension_semantics<parallel>], iteration_bounds = array<i64: 1>, scalar_prefetch = 0 : i64, scratch_operands = 0 : i64, tpu.core_type = #tpu.core_type<tc>, window_params = [{transform_indices = @transform_0, window_bounds = array<i64: 128, 48>}, {pipeline_mode = #tpu.pipeline_mode<synchronous>, transform_indices = @transform_1, window_bounds = array<i64: 48, 128>}, {pipeline_mode = #tpu.pipeline_mode<synchronous>, transform_indices = @transform_2, window_bounds = array<i64: 1, 128>}, {transform_indices = @transform_3, window_bounds = array<i64: 128, 128>}]} {
    %c0 = arith.constant 0 : index
    %c0_0 = arith.constant 0 : index
    %0 = vector.load %arg1[%c0, %c0_0] : memref<128x48xf32, #tpu.memory_space<vmem>>, vector<128x48xf32>
    %c0_1 = arith.constant 0 : index
    %c0_2 = arith.constant 0 : index
    %1 = vector.load %arg2[%c0_1, %c0_2] : memref<48x128xf32, #tpu.memory_space<vmem>>, vector<48x128xf32>
    %cst = arith.constant dense<0.000000e+00> : vector<128x128xf32>
    %2 = tpu.matmul %0, %1, %cst {dimension_numbers = #tpu.dot_dimension_numbers<[1], [0], [0], [1], [0, 0, 1, 1], [], []>} : vector<128x48xf32>, vector<48x128xf32>, vector<128x128xf32> -> vector<128x128xf32>
    %c0_3 = arith.constant 0 : index
    %c0_4 = arith.constant 0 : index
    %3 = vector.load %arg3[%c0_3, %c0_4] : memref<1x128xf32, #tpu.memory_space<vmem>>, vector<1x128xf32>
    %4 = vector.broadcast %3 : vector<1x128xf32> to vector<128x128xf32>
    %5 = arith.addf %2, %4 : vector<128x128xf32>
    %cst_5 = arith.constant 0.000000e+00 : f32
    %6 = vector.broadcast %cst_5 : f32 to vector<128x128xf32>
    %7 = arith.maximumf %5, %6 : vector<128x128xf32>
    %8 = arith.truncf %7 : vector<128x128xf32> to vector<128x128xbf16>
    %c0_6 = arith.constant 0 : index
    %c0_7 = arith.constant 0 : index
    %9 = vector.load %arg4[%c0_6, %c0_7] : memref<128x128xbf16, #tpu.memory_space<vmem>>, vector<128x128xbf16>
    tpu.vector_store %arg4[%c0_6, %c0_7], %8 {strides = array<i32>} : memref<128x128xbf16, #tpu.memory_space<vmem>>, vector<128x128xbf16>,
    return
  }
  func.func @transform_0(%arg0: i32) -> (i32, i32) {
    %c0_i32 = arith.constant 0 : i32
    %c0_i32_0 = arith.constant 0 : i32
    return %arg0, %c0_i32 : i32, i32
  }
  func.func @transform_1(%arg0: i32) -> (i32, i32) {
    %c0_i32 = arith.constant 0 : i32
    %c0_i32_0 = arith.constant 0 : i32
    %c0_i32_1 = arith.constant 0 : i32
    return %c0_i32, %c0_i32_0 : i32, i32
  }
  func.func @transform_2(%arg0: i32) -> (i32, i32) {
    %c0_i32 = arith.constant 0 : i32
    %c0_i32_0 = arith.constant 0 : i32
    %c0_i32_1 = arith.constant 0 : i32
    return %c0_i32, %c0_i32_0 : i32, i32
  }
  func.func @transform_3(%arg0: i32) -> (i32, i32) {
    %c0_i32 = arith.constant 0 : i32
    %c0_i32_0 = arith.constant 0 : i32
    return %arg0, %c0_i32 : i32, i32
  }
}

</mosaic_0001>

<llo_original>
// kernel: tpu_custom_call.1
$region0: #{tpu_custom_call.1}
  #allocation0 [shape = 'u32[]', space=smem, size = 0x4, offset = 0x4, fixed_abs, tag = 'smem constant byte address 0x4 - core index']
  #allocation1 [shape = 'u32[144,128]{1,0:T(1,128)}', space=vmem, size = 0x12000, scoped, tag = 'internal scratch']
  %s0 = inlined_call_operand.vmem [shape: f32[128,48], index: 0, kind: input, shape index: {}]
  %s1 = inlined_call_operand.vmem [shape: f32[48,128], index: 1, kind: input, shape index: {}]
  %s2 = inlined_call_operand.vmem [shape: f32[1,128], index: 2, kind: input, shape index: {}]
  %s3 = inlined_call_operand.hbm [shape: bf16[128,128], index: 3, kind: output, shape index: {}]
  %s4 = sld [smem:[#allocation0]]
  $region22: #{tpu_custom_call.1} parent=0
    _
  %s6 = ssub.s32 1, %s4
  %s7 = scalar_select 0, %s6, %s4
  $region1: #{tpu_custom_call.1} parent=0
    #allocation2 [shape = 'u8[32768]{0}', space=vmem, size = 0x8000, scoped, tag = 'output window, operand 0, single buffered']
    #allocation3 [shape = 's32[1]{0}', space=sflag, size = 0x4, scoped, tag = 'scoped memory for tpu_custom_call.1']
    %8 = vsyncpa [#allocation3], 0
    // Predicated region
    $region2: #{tpu_custom_call.1} parent=1 // pred_check
      _
    $region3: #{tpu_custom_call.1} parent=1 // pred_check_branch
      %10 = sbr.rel (0) target = $region5
    $region4: #{tpu_custom_call.1} parent=1 // pred_region
      _
    $region5: #{tpu_custom_call.1} parent=1 // pred_fallthru
      _
    // Predicated region
    $region6: #{tpu_custom_call.1} parent=1 // pred_check
      _
    $region7: #{tpu_custom_call.1} parent=1 // pred_check_branch
      %12 = sbr.rel (0) target = $region9
    $region8: #{tpu_custom_call.1} parent=1 // pred_region
      _
    $region9: #{tpu_custom_call.1} parent=1 // pred_fallthru
      _
    // Predicated region
    $region10: #{tpu_custom_call.1} parent=1 // pred_check
      _
    $region11: #{tpu_custom_call.1} parent=1 // pred_check_branch
      %14 = sbr.rel (0) target = $region13
    $region12: #{tpu_custom_call.1} parent=1 // pred_region
      _
    $region13: #{tpu_custom_call.1} parent=1 // pred_fallthru
      _
    %v15 = vld [vmem:[%s0] sm:$0xff]
    %v16 = vld [vmem:[%s0 + $0x8] sm:$0xff]
    %v17 = vld [vmem:[%s0 + $0x10] sm:$0xff]
    %v18 = vld [vmem:[%s0 + $0x18] sm:$0xff]
    %v19 = vld [vmem:[%s0 + $0x20] sm:$0xff]
    %v20 = vld [vmem:[%s0 + $0x28] sm:$0xff]
    %v21 = vld [vmem:[%s0 + $0x30] sm:$0xff]
    %v22 = vld [vmem:[%s0 + $0x38] sm:$0xff]
    %v23 = vld [vmem:[%s0 + $0x40] sm:$0xff]
    %v24 = vld [vmem:[%s0 + $0x48] sm:$0xff]
    %v25 = vld [vmem:[%s0 + $0x50] sm:$0xff]
    %v26 = vld [vmem:[%s0 + $0x58] sm:$0xff]
    %v27 = vld [vmem:[%s0 + $0x60] sm:$0xff]
    %v28 = vld [vmem:[%s0 + $0x68] sm:$0xff]
    %v29 = vld [vmem:[%s0 + $0x70] sm:$0xff]
    %v30 = vld [vmem:[%s0 + $0x78] sm:$0xff]
    %v31 = vld [vmem:[%s1] sm:$0xff]
    %v32 = vld [vmem:[%s1 + $0x8] sm:$0xff]
    %v33 = vld [vmem:[%s1 + $0x10] sm:$0xff]
    %v34 = vld [vmem:[%s1 + $0x18] sm:$0xff]
    %v35 = vld [vmem:[%s1 + $0x20] sm:$0xff]
    %v36 = vld [vmem:[%s1 + $0x28] sm:$0xff]
    %v37 = vld [vmem:[%s2] sm:$0x1]
    %v39 = vlaneseq
    %v40 = vshrl.u32 %v39, 7
    %v41 = vsub.s32 0, %v40
    %v42 = vrot.slane %v37, %v41
    %vm44 = vcmask 392192
    %v46 = vsel %vm44, %v15, 0
    %v49 = vsel %vm44, %v16, 0
    %v52 = vsel %vm44, %v17, 0
    %v55 = vsel %vm44, %v18, 0
    %v58 = vsel %vm44, %v19, 0
    %v61 = vsel %vm44, %v20, 0
    %v64 = vsel %vm44, %v21, 0
    %v67 = vsel %vm44, %v22, 0
    %v70 = vsel %vm44, %v23, 0
    %v73 = vsel %vm44, %v24, 0
    %v76 = vsel %vm44, %v25, 0
    %v79 = vsel %vm44, %v26, 0
    %v82 = vsel %vm44, %v27, 0
    %v85 = vsel %vm44, %v28, 0
    %v88 = vsel %vm44, %v29, 0
    %v91 = vsel %vm44, %v30, 0
    %93 = vmatprep.subr.mxu0 0.0
    %94 = vmatpush1.msra.mxu0 %v31
    %95 = vmatprep.subr.mxu0 0.0
    %96 = vmatpush1.msra.mxu0 %v32
    %97 = vmatprep.subr.mxu0 0.0
    %98 = vmatpush1.msra.mxu0 %v33
    %99 = vmatprep.subr.mxu0 0.0
    %100 = vmatpush1.msra.mxu0 %v34
    %101 = vmatprep.subr.mxu0 0.0
    %102 = vmatpush1.msra.mxu0 %v35
    %103 = vmatprep.subr.mxu0 0.0
    %104 = vmatpush1.msra.mxu0 %v36
    %105 = vmatprep.subr.mxu0 0.0
    %106 = vmatpush1.msra.mxu0 0.0
    %107 = vmatprep.subr.mxu0 0.0
    %108 = vmatpush1.msra.mxu0 0.0
    %109 = vmatprep.subr.mxu0 0.0
    %110 = vmatpush1.msra.mxu0 0.0
    %111 = vmatprep.subr.mxu0 0.0
    %112 = vmatpush1.msra.mxu0 0.0
    %113 = vmatprep.subr.mxu0 0.0
    %114 = vmatpush1.msra.mxu0 0.0
    %115 = vmatprep.subr.mxu0 0.0
    %116 = vmatpush1.msra.mxu0 0.0
    %117 = vmatprep.subr.mxu0 0.0
    %118 = vmatpush1.msra.mxu0 0.0
    %119 = vmatprep.subr.mxu0 0.0
    %120 = vmatpush1.msra.mxu0 0.0
    %121 = vmatprep.subr.mxu0 0.0
    %122 = vmatpush1.msra.mxu0 0.0
    %123 = vmatprep.subr.mxu0 0.0
    %124 = vmatpush1.msra.mxu0 0.0
    %125 = vmatprep.subr.mxu0 0.0
    %126 = vmatpush1.msra.mxu0 0.0
    %127 = vmatprep.subr.mxu0 0.0
    %128 = vmatpush1.msra.mxu0 0.0
    %129 = vmatprep.subr.mxu0 0.0
    %130 = vmatpush1.msra.mxu0 0.0
    %131 = vmatprep.subr.mxu0 0.0
    %132 = vmatpush1.msra.mxu0 0.0
    %133 = vmatprep.subr.mxu0 0.0
    %134 = vmatpush1.msra.mxu0 0.0
    %135 = vmatprep.subr.mxu0 0.0
    %136 = vmatpush1.msra.mxu0 0.0
    %137 = vmatprep.subr.mxu0 0.0
    %138 = vmatpush1.msra.mxu0 0.0
    %139 = vmatprep.subr.mxu0 0.0
    %140 = vmatpush1.msra.mxu0 0.0
    %141 = vmatprep.subr.mxu0 0.0
    %142 = vmatpush1.msra.mxu0 0.0
    %143 = vmatprep.subr.mxu0 0.0
    %144 = vmatpush1.msra.mxu0 0.0
    %145 = vmatprep.subr.mxu0 0.0
    %146 = vmatpush1.msra.mxu0 0.0
    %147 = vmatprep.subr.mxu0 0.0
    %148 = vmatpush1.msra.mxu0 0.0
    %149 = vmatprep.subr.mxu0 0.0
    %150 = vmatpush1.msra.mxu0 0.0
    %151 = vmatprep.subr.mxu0 0.0
    %152 = vmatpush1.msra.mxu0 0.0
    %153 = vmatprep.subr.mxu0 0.0
    %154 = vmatpush1.msra.mxu0 0.0
    %155 = vmatprep.subr.mxu0 0.0
    %156 = vmatpush1.msra.mxu0 0.0
    %157 = vmatprep.mubr.f32.mxu0 0.0
    %158 = vmatmul.mubr.f32.gmra.mrb[0].mxu0 %v46
    %v159 = vpop.f32.mrb[0].mxu0
    %v160 = vadd.f32 %v42, %v159
    %v161 = vpop.f32.mrb[0].mxu0
    %162 = vmatprep.mubr.f32.mxu0 0.0
    %163 = vmatmul.mubr.f32.gmra.mrb[0].mxu0 %v49
    %v164 = vpop.f32.mrb[0].mxu0
    %v165 = vadd.f32 %v42, %v164
    %v166 = vpop.f32.mrb[0].mxu0
    %167 = vmatprep.mubr.f32.mxu0 0.0
    %168 = vmatmul.mubr.f32.gmra.mrb[0].mxu0 %v52
    %v169 = vpop.f32.mrb[0].mxu0
    %v170 = vadd.f32 %v42, %v169
    %v171 = vpop.f32.mrb[0].mxu0
    %172 = vmatprep.mubr.f32.mxu0 0.0
    %173 = vmatmul.mubr.f32.gmra.mrb[0].mxu0 %v55
    %v174 = vpop.f32.mrb[0].mxu0
    %v175 = vadd.f32 %v42, %v174
    %v176 = vpop.f32.mrb[0].mxu0
    %177 = vmatprep.mubr.f32.mxu0 0.0
    %178 = vmatmul.mubr.f32.gmra.mrb[0].mxu0 %v58
    %v179 = vpop.f32.mrb[0].mxu0
    %v180 = vadd.f32 %v42, %v179
    %v181 = vpop.f32.mrb[0].mxu0
    %182 = vmatprep.mubr.f32.mxu0 0.0
    %183 = vmatmul.mubr.f32.gmra.mrb[0].mxu0 %v61
    %v184 = vpop.f32.mrb[0].mxu0
    %v185 = vadd.f32 %v42, %v184
    %v186 = vpop.f32.mrb[0].mxu0
    %187 = vmatprep.mubr.f32.mxu0 0.0
    %188 = vmatmul.mubr.f32.gmra.mrb[0].mxu0 %v64
    %v189 = vpop.f32.mrb[0].mxu0
    %v190 = vadd.f32 %v42, %v189
    %v191 = vpop.f32.mrb[0].mxu0
    %192 = vmatprep.mubr.f32.mxu0 0.0
    %193 = vmatmul.mubr.f32.gmra.mrb[0].mxu0 %v67
    %v194 = vpop.f32.mrb[0].mxu0
    %v195 = vadd.f32 %v42, %v194
    %v196 = vpop.f32.mrb[0].mxu0
    %197 = vmatprep.mubr.f32.mxu0 0.0
    %198 = vmatmul.mubr.f32.gmra.mrb[0].mxu0 %v70
    %v199 = vpop.f32.mrb[0].mxu0
    %v200 = vadd.f32 %v42, %v199
    %v201 = vpop.f32.mrb[0].mxu0
    %202 = vmatprep.mubr.f32.mxu0 0.0
    %203 = vmatmul.mubr.f32.gmra.mrb[0].mxu0 %v73
    %v204 = vpop.f32.mrb[0].mxu0
    %v205 = vadd.f32 %v42, %v204
    %v206 = vpop.f32.mrb[0].mxu0
    %207 = vmatprep.mubr.f32.mxu0 0.0
    %208 = vmatmul.mubr.f32.gmra.mrb[0].mxu0 %v76
    %v209 = vpop.f32.mrb[0].mxu0
    %v210 = vadd.f32 %v42, %v209
    %v211 = vpop.f32.mrb[0].mxu0
    %212 = vmatprep.mubr.f32.mxu0 0.0
    %213 = vmatmul.mubr.f32.gmra.mrb[0].mxu0 %v79
    %v214 = vpop.f32.mrb[0].mxu0
    %v215 = vadd.f32 %v42, %v214
    %v216 = vpop.f32.mrb[0].mxu0
    %217 = vmatprep.mubr.f32.mxu0 0.0
    %218 = vmatmul.mubr.f32.gmra.mrb[0].mxu0 %v82
    %v219 = vpop.f32.mrb[0].mxu0
    %v220 = vadd.f32 %v42, %v219
    %v221 = vpop.f32.mrb[0].mxu0
    %222 = vmatprep.mubr.f32.mxu0 0.0
    %223 = vmatmul.mubr.f32.gmra.mrb[0].mxu0 %v85
    %v224 = vpop.f32.mrb[0].mxu0
    %v225 = vadd.f32 %v42, %v224
    %v226 = vpop.f32.mrb[0].mxu0
    %227 = vmatprep.mubr.f32.mxu0 0.0
    %228 = vmatmul.mubr.f32.gmra.mrb[0].mxu0 %v88
    %v229 = vpop.f32.mrb[0].mxu0
    %v230 = vadd.f32 %v42, %v229
    %v231 = vpop.f32.mrb[0].mxu0
    %232 = vmatprep.mubr.f32.mxu0 0.0
    %233 = vmatmul.mubr.f32.gmra.mrb[0].mxu0 %v91
    %v234 = vpop.f32.mrb[0].mxu0
    %v235 = vadd.f32 %v42, %v234
    %v236 = vpop.f32.mrb[0].mxu0
    %237 = vdwg.mxu0
    %v238 = vmax.f32 %v160, 0.0
    %v239 = vmax.f32 %v165, 0.0
    %v240 = vmax.f32 %v170, 0.0
    %v241 = vmax.f32 %v175, 0.0
    %v242 = vmax.f32 %v180, 0.0
    %v243 = vmax.f32 %v185, 0.0
    %v244 = vmax.f32 %v190, 0.0
    %v245 = vmax.f32 %v195, 0.0
    %v246 = vmax.f32 %v200, 0.0
    %v247 = vmax.f32 %v205, 0.0
    %v248 = vmax.f32 %v210, 0.0
    %v249 = vmax.f32 %v215, 0.0
    %v250 = vmax.f32 %v220, 0.0
    %v251 = vmax.f32 %v225, 0.0
    %v252 = vmax.f32 %v230, 0.0
    %v253 = vmax.f32 %v235, 0.0
    %v254 = vpack.c.bf16 %v239, %v238
    %v255 = vpack.c.bf16 %v241, %v240
    %v256 = vpack.c.bf16 %v243, %v242
    %v257 = vpack.c.bf16 %v245, %v244
    %v258 = vpack.c.bf16 %v247, %v246
    %v259 = vpack.c.bf16 %v249, %v248
    %v260 = vpack.c.bf16 %v251, %v250
    %v261 = vpack.c.bf16 %v253, %v252
    %v270 = vunpack.c.l.b16 %v254
    %v271 = vunpack.c.h.b16 %v254
    %v272 = vunpack.c.l.b16 %v255
    %v273 = vunpack.c.h.b16 %v255
    %v274 = vunpack.c.l.b16 %v256
    %v275 = vunpack.c.h.b16 %v256
    %v276 = vunpack.c.l.b16 %v257
    %v277 = vunpack.c.h.b16 %v257
    %v278 = vunpack.c.l.b16 %v258
    %v279 = vunpack.c.h.b16 %v258
    %v280 = vunpack.c.l.b16 %v259
    %v281 = vunpack.c.h.b16 %v259
    %v282 = vunpack.c.l.b16 %v260
    %v283 = vunpack.c.h.b16 %v260
    %v284 = vunpack.c.l.b16 %v261
    %v285 = vunpack.c.h.b16 %v261
    %v286 = vpack.c.b16 %v270, %v270
    %v287 = vpack.c.b16 %v271, %v271
    %v288 = vpack.c.b16 %v272, %v272
    %v289 = vpack.c.b16 %v273, %v273
    %v290 = vpack.c.b16 %v274, %v274
    %v291 = vpack.c.b16 %v275, %v275
    %v292 = vpack.c.b16 %v276, %v276
    %v293 = vpack.c.b16 %v277, %v277
    %v294 = vpack.c.b16 %v278, %v278
    %v295 = vpack.c.b16 %v279, %v279
    %v296 = vpack.c.b16 %v280, %v280
    %v297 = vpack.c.b16 %v281, %v281
    %v298 = vpack.c.b16 %v282, %v282
    %v299 = vpack.c.b16 %v283, %v283
    %v300 = vpack.c.b16 %v284, %v284
    %v301 = vpack.c.b16 %v285, %v285
    %318 = vst [vmem:[#allocation2] sm:$0xf] %v286
    %319 = vst [vmem:[#allocation2 + $0x4] sm:$0xf] %v287
    %320 = vst [vmem:[#allocation2 + $0x8] sm:$0xf] %v288
    %321 = vst [vmem:[#allocation2 + $0xc] sm:$0xf] %v289
    %322 = vst [vmem:[#allocation2 + $0x10] sm:$0xf] %v290
    %323 = vst [vmem:[#allocation2 + $0x14] sm:$0xf] %v291
    %324 = vst [vmem:[#allocation2 + $0x18] sm:$0xf] %v292
    %325 = vst [vmem:[#allocation2 + $0x1c] sm:$0xf] %v293
    %326 = vst [vmem:[#allocation2 + $0x20] sm:$0xf] %v294
    %327 = vst [vmem:[#allocation2 + $0x24] sm:$0xf] %v295
    %328 = vst [vmem:[#allocation2 + $0x28] sm:$0xf] %v296
    %329 = vst [vmem:[#allocation2 + $0x2c] sm:$0xf] %v297
    %330 = vst [vmem:[#allocation2 + $0x30] sm:$0xf] %v298
    %331 = vst [vmem:[#allocation2 + $0x34] sm:$0xf] %v299
    %332 = vst [vmem:[#allocation2 + $0x38] sm:$0xf] %v300
    %333 = vst [vmem:[#allocation2 + $0x3c] sm:$0xf] %v301
    // Predicated region
    $region14: #{tpu_custom_call.1} parent=1 // pred_check
      _
    $region15: #{tpu_custom_call.1} parent=1 // pred_check_branch
      %335 = sbr.rel (0) target = $region17
    $region16: #{tpu_custom_call.1} parent=1 // pred_region
      %s337 = ssub.s32 1024, 1024
      %338 = vsyncadd [#allocation3], %s337
      %s339 = sshll.u32 [#allocation2], 4
      %s340 = int_to_ptr.vmem [resolvable:$true] %s339
      %345 = dma.vmem_to_hbm [thread:$0]  %s340, 1024, %s3, [#allocation3], 64, 64, 4
    $region17: #{tpu_custom_call.1} parent=1 // pred_fallthru
      _
    // Predicated region
    $region18: #{tpu_custom_call.1} parent=1 // pred_check
      _
    $region19: #{tpu_custom_call.1} parent=1 // pred_check_branch
      %347 = sbr.rel (0) target = $region21
    $region20: #{tpu_custom_call.1} parent=1 // pred_region
      %348 = dma.done [#allocation3], 1024
    $region21: #{tpu_custom_call.1} parent=1 // pred_fallthru
      _
    %349 = vsyncpa [#allocation3], 1

</llo_original>
